<compile_context>
chip_gen: v7x
topology: tpu7x:2x2x1
jax: 0.10.0
libtpu: 0.0.40
codegen_flags: <defaults>
</compile_context>

<pallas_src>
import math

import jax
import jax.numpy as jnp
from jax import lax
from jax.experimental import pallas as pl
from jax.experimental.pallas import tpu as pltpu


def _make_kernel(*, ng, tn, split, steps, expand, needs_mask):
    """Per-lane weighted column sums, accumulated over the node (j) grid axis."""

    def kernel(w_ref, e_ref, pred_ref, tgt_ref, out_ref):
        p = pl.program_id(0)
        j = pl.program_id(1)

        @pl.when(j == 0)
        def _():
            out_ref[...] = jnp.zeros_like(out_ref)

        # Cast each operand to f32 *before* subtracting (bf16-safe, f32 math).
        diff = pred_ref[...].astype(jnp.float32) - tgt_ref[...].astype(jnp.float32)
        w = w_ref[...].astype(jnp.float32)                       # (tn, g) compact

        if expand:
            # Per-lane weights via a tiny MXU matmul against the resident 0/1
            # expansion matrix (g, lane); fully hidden under the HBM stream.
            w_lane = jnp.dot(w, e_ref[...], preferred_element_type=jnp.float32)
        else:
            # g == 1 (broadcast over features) or f == 1 (already per-lane).
            w_lane = w

        prod = diff * w_lane                                     # (tn, lane) f32

        if needs_mask:
            block_idx = j if split == 1 else (p % split) * steps + j
            rows_left = ng - block_idx * tn

            @pl.when(rows_left >= tn)
            def _():
                out_ref[...] += jnp.sum(prod, axis=0, keepdims=True)

            @pl.when(rows_left < tn)
            def _():
                rid = lax.broadcasted_iota(jnp.int32, prod.shape, 0)
                out_ref[...] += jnp.sum(
                    jnp.where(rid < rows_left, prod, 0.0), axis=0, keepdims=True)
        else:
            out_ref[...] += jnp.sum(prod, axis=0, keepdims=True)

    return kernel


def _divisors(n):
    out = set()
    i = 1
    while i * i <= n:
        if n % i == 0:
            out.add(i)
            out.add(n // i)
        i += 1
    return sorted(out)


def _pick_fold(n, f, max_exact_g=64):
    """Nodes-per-row g so lane = g*f is dense (ideally a multiple of 128)."""
    m = 128 // math.gcd(f, 128)          # minimal g with (g*f) % 128 == 0
    if m == 1:
        return 1                          # f already a multiple of 128
    if m <= max_exact_g and n % m == 0:
        return m                          # exact lane fill, cheap expansion
    if f >= 128:
        return 1                          # modest padding, no expansion needed
    # Partial fill: best divisor of n that fits inside one 128-lane vreg.
    return max(d for d in _divisors(n) if d * f <= 128)


def _pick_row_tile(ng, lane, itemsize, target_step_bytes, vmem_data_budget,
                   max_rows=16384):
    """Row tile (multiple of 8, or full ng) targeting ~target_step_bytes/step."""
    lane_pad = ((lane + 127) // 128) * 128
    rows_hbm = target_step_bytes // max(1, 2 * lane * itemsize)
    # VMEM: pred+tgt double-buffered (lane-padded) + compact weights (padded to
    # 128 lanes in VMEM), also double-buffered.
    per_row_vmem = 4 * lane_pad * itemsize + 2 * 128 * 4
    rows_vmem = vmem_data_budget // per_row_vmem
    rows = max(8, min(rows_hbm, rows_vmem, max_rows))
    rows = (rows // 8) * 8
    return ng if rows >= ng else rows


def base_weighted_loss(pred, target, node_weights, squash=True, *,
                       target_step_bytes=8 * 1024 * 1024,
                       vmem_data_budget=24 * 1024 * 1024,
                       vmem_limit_bytes=40 * 1024 * 1024):
    """Pallas implementation of BaseWeightedLoss.forward (empty ScaleTensor).

    pred, target: (bs, ensemble, nodes, n_outputs)   (any float dtype)
    node_weights: (nodes,)
    returns float32 scalar if squash else float32 (n_outputs,)
    """
    bs, ens, n, f = pred.shape
    assert target.shape == pred.shape
    assert node_weights.shape == (n,)
    b = bs * ens

    g = _pick_fold(n, f)
    ng = n // g
    lane = g * f

    # Copy-free reshapes; pred/target stream in their native dtype.
    pred3 = pred.reshape(b, ng, lane)
    tgt3 = target.reshape(b, ng, lane)
    w32 = node_weights.astype(jnp.float32)
    wc = w32.reshape(ng, g)                       # compact weights (~n*4 bytes)

    itemsize = jnp.dtype(pred.dtype).itemsize
    tn = _pick_row_tile(ng, lane, itemsize, target_step_bytes, vmem_data_budget)
    nblocks = -(-ng // tn)

    # Megacore coverage: when bs*ens == 1, split the node axis into 2 parallel
    # chunks so both v7x TensorCores stream half the data each.
    split = 2 if (b == 1 and nblocks >= 2) else 1
    steps = -(-nblocks // split)
    num_par = b * split

    pad_rows = nblocks * tn - ng                  # cheap: weights are tiny
    if pad_rows:
        wc = jnp.pad(wc, ((0, pad_rows), (0, 0)))

    expand = (g > 1) and (f > 1)
    if expand:
        # exp_mat[i, j] = 1 iff j // f == i  ->  (w @ exp_mat)[r, j] = w[r, j//f]
        exp_mat = jnp.kron(jnp.eye(g, dtype=jnp.float32),
                           jnp.ones((1, f), dtype=jnp.float32))   # (g, lane)
    else:
        exp_mat = jnp.zeros((8, 128), dtype=jnp.float32)          # unread placeholder

    needs_mask = split * steps * tn > ng

    if split == 1:
        batch_of = lambda p: p
        block_of = lambda p, j: j
    else:
        batch_of = lambda p: p // split
        block_of = lambda p, j: (p % split) * steps + j

    def clamped_block(p, j):
        # Never issue a fully out-of-range block index (kernel masks instead).
        return jnp.minimum(block_of(p, j), nblocks - 1)

    data_spec = pl.BlockSpec((None, tn, lane),
                             lambda p, j: (batch_of(p), clamped_block(p, j), 0))
    w_spec = pl.BlockSpec((tn, g), lambda p, j: (clamped_block(p, j), 0))
    e_spec = pl.BlockSpec(exp_mat.shape, lambda p, j: (0, 0))     # resident
    out_spec = pl.BlockSpec((None, 1, lane), lambda p, j: (p, 0, 0))

    kernel = _make_kernel(ng=ng, tn=tn, split=split, steps=steps,
                          expand=expand, needs_mask=needs_mask)

    out = pl.pallas_call(
        kernel,
        out_shape=jax.ShapeDtypeStruct((num_par, 1, lane), jnp.float32),
        grid_spec=pltpu.PrefetchScalarGridSpec(
            num_scalar_prefetch=0,
            grid=(num_par, steps),
            in_specs=[w_spec, e_spec, data_spec, data_spec],
            out_specs=out_spec,
        ),
        compiler_params=pltpu.CompilerParams(
            dimension_semantics=("parallel", "arbitrary"),
            vmem_limit_bytes=vmem_limit_bytes,
        ),
    )(wc, exp_mat, pred3, tgt3)

    col = jnp.sum(out.reshape(num_par, lane), axis=0)             # (lane,) f32
    # Exact denominator: sum(node_weights.expand_as(x)) == bs*ens*sum(node_weights).
    denom = b * jnp.sum(w32)
    if squash:
        return jnp.sum(col) / (f * denom)                         # f32 scalar
    return col.reshape(g, f).sum(axis=0) / denom                  # f32 (n_outputs,)


def _reference(pred, target, node_weights, squash=True):
    """Pure-JAX reference mirroring the PyTorch forward (f32 math)."""
    x = pred.astype(jnp.float32) - target.astype(jnp.float32)
    w = node_weights.astype(jnp.float32)
    if squash:
        xm = jnp.mean(x, axis=-1)                                 # (bs, ens, N)
        wexp = jnp.broadcast_to(w, xm.shape)
        return jnp.sum(xm * wexp / jnp.sum(wexp))
    wexp = jnp.broadcast_to(w[..., None], x.shape)
    return jnp.sum(x * wexp / jnp.sum(wexp, axis=(0, 1, 2)), axis=(0, 1, 2))


def _run_case(key, bs, ens, n, f, dtype=jnp.float32, **kw):
    k1, k2, k3 = jax.random.split(key, 3)
    pred = jax.random.normal(k1, (bs, ens, n, f), dtype=jnp.float32).astype(dtype)
    target = jax.random.normal(k2, (bs, ens, n, f), dtype=jnp.float32).astype(dtype)
    node_weights = jax.random.uniform(k3, (n,), dtype=jnp.float32,
                                      minval=0.1, maxval=1.0)
    for squash in (True, False):
        got = jax.block_until_ready(
            base_weighted_loss(pred, target, node_weights, squash=squash, **kw))
        ref = _reference(pred, target, node_weights, squash=squash)
        assert got.shape == ref.shape, (squash, got.shape, ref.shape)
        assert jnp.allclose(got, ref, atol=1e-5, rtol=1e-4), (squash, got, ref)


if __name__ == "__main__":
    key = jax.random.PRNGKey(0)
    ks = jax.random.split(key, 5)

    # Exact lane fold (g=16, lane=128) + MXU weight expansion, batch-parallel grid.
    _run_case(ks[0], bs=2, ens=2, n=64, f=8)
    # Wide features (f >= 128): no fold, (tn, 1) broadcast weights.
    _run_case(ks[1], bs=1, ens=2, n=64, f=128)
    # bs*ens == 1: node axis split over 2 parallel chunks + masked partial block.
    _run_case(ks[2], bs=1, ens=1, n=200, f=8, target_step_bytes=4096)
    # Multi-step node reduction with a partial last block, bf16 inputs.
    _run_case(ks[3], bs=2, ens=1, n=2000, f=8, dtype=jnp.bfloat16,
              target_step_bytes=8192)
    # f == 1: compact weights are already per-lane (no expansion matrix).
    _run_case(ks[4], bs=1, ens=1, n=256, f=1)

    print("KERNEL_OK")
</pallas_src>

<mosaic_0001>
module attributes {stable_mosaic.version = 11 : i64} {
  func.func @kernel(%arg0: i32, %arg1: i32, %arg2: memref<4x16xf32, #tpu.memory_space<vmem>>, %arg3: memref<16x128xf32, #tpu.memory_space<vmem>>, %arg4: memref<1x4x128xf32, #tpu.memory_space<vmem>>, %arg5: memref<1x4x128xf32, #tpu.memory_space<vmem>>, %arg6: memref<1x1x128xf32, #tpu.memory_space<vmem>>) attributes {dimension_semantics = [#tpu.dimension_semantics<parallel>, #tpu.dimension_semantics<arbitrary>], iteration_bounds = array<i64: 4, 1>, scalar_prefetch = 0 : i64, scratch_operands = 0 : i64, tpu.core_type = #tpu.core_type<tc>, window_params = [{transform_indices = @transform_0, window_bounds = array<i64: 4, 16>}, {pipeline_mode = #tpu.pipeline_mode<synchronous>, transform_indices = @transform_1, window_bounds = array<i64: 16, 128>}, {transform_indices = @transform_2, window_bounds = array<i64: 1, 4, 128>}, {transform_indices = @transform_3, window_bounds = array<i64: 1, 4, 128>}, {transform_indices = @transform_4, window_bounds = array<i64: 1, 1, 128>}]} {
    %c0_i32 = arith.constant 0 : i32
    %0 = arith.cmpi eq, %arg1, %c0_i32 : i32
    %1 = arith.extui %0 : i1 to i32
    %c0_i32_0 = arith.constant 0 : i32
    %2 = arith.cmpi ne, %1, %c0_i32_0 : i32
    scf.if %2 {
      %cst_17 = arith.constant 0.000000e+00 : f32
      %20 = vector.broadcast %cst_17 : f32 to vector<1x128xf32>
      %c0_18 = arith.constant 0 : index
      %c0_19 = arith.constant 0 : index
      %c0_20 = arith.constant 0 : index
      %21 = vector.load %arg6[%c0_18, %c0_19, %c0_20] : memref<1x1x128xf32, #tpu.memory_space<vmem>>, vector<1x1x128xf32>
      %22 = vector.shape_cast %21 : vector<1x1x128xf32> to vector<1x128xf32>
      %23 = vector.shape_cast %20 : vector<1x128xf32> to vector<1x1x128xf32>
      tpu.vector_store %arg6[%c0_18, %c0_19, %c0_20], %23 {strides = array<i32>} : memref<1x1x128xf32, #tpu.memory_space<vmem>>, vector<1x1x128xf32>,
    } else {
    }
    %c0 = arith.constant 0 : index
    %c0_1 = arith.constant 0 : index
    %c0_2 = arith.constant 0 : index
    %3 = vector.load %arg4[%c0, %c0_1, %c0_2] : memref<1x4x128xf32, #tpu.memory_space<vmem>>, vector<1x4x128xf32>
    %4 = vector.shape_cast %3 : vector<1x4x128xf32> to vector<4x128xf32>
    %c0_3 = arith.constant 0 : index
    %c0_4 = arith.constant 0 : index
    %c0_5 = arith.constant 0 : index
    %5 = vector.load %arg5[%c0_3, %c0_4, %c0_5] : memref<1x4x128xf32, #tpu.memory_space<vmem>>, vector<1x4x128xf32>
    %6 = vector.shape_cast %5 : vector<1x4x128xf32> to vector<4x128xf32>
    %7 = arith.subf %4, %6 : vector<4x128xf32>
    %c0_6 = arith.constant 0 : index
    %c0_7 = arith.constant 0 : index
    %8 = vector.load %arg2[%c0_6, %c0_7] : memref<4x16xf32, #tpu.memory_space<vmem>>, vector<4x16xf32>
    %c0_8 = arith.constant 0 : index
    %c0_9 = arith.constant 0 : index
    %9 = vector.load %arg3[%c0_8, %c0_9] : memref<16x128xf32, #tpu.memory_space<vmem>>, vector<16x128xf32>
    %cst = arith.constant dense<0.000000e+00> : vector<4x128xf32>
    %10 = tpu.matmul %8, %9, %cst {dimension_numbers = #tpu.dot_dimension_numbers<[1], [0], [0], [1], [0, 0, 1, 1], [], []>} : vector<4x16xf32>, vector<16x128xf32>, vector<4x128xf32> -> vector<4x128xf32>
    %11 = arith.mulf %7, %10 : vector<4x128xf32>
    %c0_10 = arith.constant 0 : index
    %c0_11 = arith.constant 0 : index
    %c0_12 = arith.constant 0 : index
    %12 = vector.load %arg6[%c0_10, %c0_11, %c0_12] : memref<1x1x128xf32, #tpu.memory_space<vmem>>, vector<1x1x128xf32>
    %13 = vector.shape_cast %12 : vector<1x1x128xf32> to vector<1x128xf32>
    %cst_13 = arith.constant dense<0.000000e+00> : vector<128xf32>
    %14 = vector.multi_reduction <add>, %11, %cst_13 [0] : vector<4x128xf32> to vector<128xf32>
    %15 = vector.shape_cast %14 : vector<128xf32> to vector<1x128xf32>
    %16 = arith.addf %13, %15 : vector<1x128xf32>
    %c0_14 = arith.constant 0 : index
    %c0_15 = arith.constant 0 : index
    %c0_16 = arith.constant 0 : index
    %17 = vector.load %arg6[%c0_14, %c0_15, %c0_16] : memref<1x1x128xf32, #tpu.memory_space<vmem>>, vector<1x1x128xf32>
    %18 = vector.shape_cast %17 : vector<1x1x128xf32> to vector<1x128xf32>
    %19 = vector.shape_cast %16 : vector<1x128xf32> to vector<1x1x128xf32>
    tpu.vector_store %arg6[%c0_14, %c0_15, %c0_16], %19 {strides = array<i32>} : memref<1x1x128xf32, #tpu.memory_space<vmem>>, vector<1x1x128xf32>,
    return
  }
  func.func @transform_0(%arg0: i32, %arg1: i32) -> (i32, i32) {
    %c0_i32 = arith.constant 0 : i32
    %0 = arith.minsi %arg1, %c0_i32 : i32
    %c0_i32_0 = arith.constant 0 : i32
    %c0_i32_1 = arith.constant 0 : i32
    return %0, %c0_i32_0 : i32, i32
  }
  func.func @transform_1(%arg0: i32, %arg1: i32) -> (i32, i32) {
    %c0_i32 = arith.constant 0 : i32
    %c0_i32_0 = arith.constant 0 : i32
    %c0_i32_1 = arith.constant 0 : i32
    return %c0_i32, %c0_i32_0 : i32, i32
  }
  func.func @transform_2(%arg0: i32, %arg1: i32) -> (i32, i32, i32) {
    %c0_i32 = arith.constant 0 : i32
    %0 = arith.minsi %arg1, %c0_i32 : i32
    %c0_i32_0 = arith.constant 0 : i32
    %c0_i32_1 = arith.constant 0 : i32
    return %arg0, %0, %c0_i32_0 : i32, i32, i32
  }
  func.func @transform_3(%arg0: i32, %arg1: i32) -> (i32, i32, i32) {
    %c0_i32 = arith.constant 0 : i32
    %0 = arith.minsi %arg1, %c0_i32 : i32
    %c0_i32_0 = arith.constant 0 : i32
    %c0_i32_1 = arith.constant 0 : i32
    return %arg0, %0, %c0_i32_0 : i32, i32, i32
  }
  func.func @transform_4(%arg0: i32, %arg1: i32) -> (i32, i32, i32) {
    %c0_i32 = arith.constant 0 : i32
    %c0_i32_0 = arith.constant 0 : i32
    %c0_i32_1 = arith.constant 0 : i32
    return %arg0, %c0_i32, %c0_i32_0 : i32, i32, i32
  }
}

</mosaic_0001>

<llo_original>
// kernel: tpu_custom_call.1
$region0: #{tpu_custom_call.1}
  #allocation0 [shape = 'u32[]', space=smem, size = 0x4, offset = 0x4, fixed_abs, tag = 'smem constant byte address 0x4 - core index']
  #allocation1 [shape = 'u32[144,128]{1,0:T(1,128)}', space=vmem, size = 0x12000, scoped, tag = 'internal scratch']
  %s0 = inlined_call_operand.hbm [shape: f32[4,16], index: 0, kind: input, shape index: {}]
  %s1 = inlined_call_operand.hbm [shape: f32[16,128], index: 1, kind: input, shape index: {}]
  %s2 = inlined_call_operand.hbm [shape: f32[4,4,128], index: 2, kind: input, shape index: {}]
  %s3 = inlined_call_operand.hbm [shape: f32[4,4,128], index: 3, kind: input, shape index: {}]
  %s4 = inlined_call_operand.hbm [shape: f32[4,1,128], index: 4, kind: output, shape index: {}]
  %s5 = sld [smem:[#allocation0]]
  $region69: #{tpu_custom_call.1} parent=0
    _
  %s7 = ssub.s32 1, %s5
  %s8 = scalar_select 0, %s7, %s5
  $region1: #{tpu_custom_call.1} parent=0
    #allocation2 [shape = 'u8[2048]{0}', space=vmem, size = 0x800, scoped, tag = 'input window, operand 0, single buffered']
    #allocation3 [shape = 's32[2]{0}', space=sflag, size = 0x8, scoped, tag = 'scoped memory for tpu_custom_call.1']
    #allocation4 [shape = 's32[2]{0}', space=sflag, size = 0x8, scoped, tag = 'scoped memory for tpu_custom_call.1']
    #allocation5 [shape = 'u8[8192]{0}', space=vmem, size = 0x2000, scoped, tag = 'input window, operand 1, single buffered']
    #allocation6 [shape = 's32[1]{0}', space=sflag, size = 0x4, scoped, tag = 'scoped memory for tpu_custom_call.1']
    #allocation7 [shape = 'u8[4096]{0}', space=vmem, size = 0x1000, scoped, tag = 'input window, operand 2']
    #allocation8 [shape = 'u8[4096]{0}', space=vmem, size = 0x1000, scoped, tag = 'input window, operand 3']
    #allocation9 [shape = 'u8[1024]{0}', space=vmem, size = 0x400, scoped, tag = 'output window, operand 0']
    %9 = vsyncpa [#allocation3], 0
    %10 = vsyncpa [#allocation6], 0
    %11 = vsyncpa [#allocation4], 0
    %s12 = scalar_lea.sflag [#allocation4], 1
    %13 = vsyncpa %s12, 0
    loop: start=0, step=1, limit=6
    $region2: #{tpu_custom_call.1} parent=1 // loop_pre_header
      _
    $region3: #{tpu_custom_call.1} parent=1 // loop_header
      %s15 = sphi 0, %s19
      %p16 = scmp.ge.s32.totalorder %s15, 6
      %s22 = sphi 0, %s34
      %s23 = sphi 0, %s30
      %s24 = sphi 0, %s22
      %s25 = sphi 0, %s23
      %s26 = sphi 0, %s24
      %s27 = sphi 0, %s25
      %s41 = sphi 0, %s43
      %s44 = sphi 0, %s41
      %s45 = sphi 0, %s44
      %s61 = sphi 0, %s45
      %s65 = sphi 0, %s65
      %s67 = sphi 0, %s65
      %s68 = sphi 0, %s67
      %s82 = sphi 0, %s68
      %s94 = sphi 0, %s96
      %s97 = sphi 0, %s94
      %s98 = sphi 0, %s97
      %s114 = sphi 0, %s98
      %s126 = sphi 0, %s128
      %s129 = sphi 0, %s126
      %s130 = sphi 0, %s129
      %s146 = sphi 0, %s130
      %s152 = sphi 0, %s154
      %s155 = sphi 0, %s152
      %s156 = sphi 0, %s155
      %s172 = sphi 0, %s156
    $region4: #{tpu_custom_call.1} parent=1 // loop_header_branch
      %18 = sbr.rel (%p16) target = $region8
    $region5: #{tpu_custom_call.1} parent=1 // loop_body
      %s20 = ssub.s32 %s15, 1
      %s21 = ssub.s32 %s15, 2
      %s28 = sadd.s32 1, %s23
      %p29 = scmp.ge.s32.totalorder %s28, 1
      %s30 = scalar_select %p29, 0, %s28
      %s31 = sadd.s32 1, %s22
      %s32 = scalar_select %p29, %s31, %s22
      %p33 = scmp.ge.s32.totalorder %s32, 4
      %s34 = scalar_select %p33, 0, %s32
      %p35 = scmp.lt.s32.totalorder %s23, 0
      %s36 = scalar_select %p35, %s23, 0
      %p37 = scmp.lt.s32.totalorder %s30, 0
      %s38 = scalar_select %p37, %s30, 0
      %s39 = ssub.s32 %s36, %s38
      %p40 = scmp.eq.s32.totalorder %s39, 0
      %s42 = sadd.s32 %s41, 1
      %s43 = scalar_select %p40, %s41, %s42
      %p46 = pneg %p40
      %p47 = scmp.eq.s32.totalorder %s15, 3
      %p48 = por %p46, %p47
      %p49 = scmp.ne.s32.totalorder %s41, %s44
      %p50 = scmp.eq.s32.totalorder %s15, 0
      %p51 = por %p49, %p50
      %p52 = scmp.ne.s32.totalorder %s41, %s44
      %p53 = scmp.eq.s32.totalorder %s20, 3
      %p54 = por %p52, %p53
      %p55 = scmp.ne.s32.totalorder %s44, %s45
      %p56 = scmp.eq.s32.totalorder %s20, 0
      %p57 = por %p55, %p56
      %p58 = scmp.ne.s32.totalorder %s44, %s45
      %p59 = scmp.eq.s32.totalorder %s21, 3
      %p60 = por %p58, %p59
      %p62 = scmp.ne.s32.totalorder %s45, %s61
      %p63 = scmp.eq.s32.totalorder %s21, 0
      %p64 = por %p62, %p63
      %s66 = sadd.s32 %s65, 1
      %p69 = scmp.eq.s32.totalorder %s15, 3
      %p70 = scmp.ne.s32.totalorder %s65, %s67
      %p71 = scmp.eq.s32.totalorder %s15, 0
      %p72 = por %p70, %p71
      %p73 = scmp.ne.s32.totalorder %s65, %s67
      %p74 = scmp.eq.s32.totalorder %s20, 3
      %p75 = por %p73, %p74
      %p76 = scmp.ne.s32.totalorder %s67, %s68
      %p77 = scmp.eq.s32.totalorder %s20, 0
      %p78 = por %p76, %p77
      %p79 = scmp.ne.s32.totalorder %s67, %s68
      %p80 = scmp.eq.s32.totalorder %s21, 3
      %p81 = por %p79, %p80
      %p83 = scmp.ne.s32.totalorder %s68, %s82
      %p84 = scmp.eq.s32.totalorder %s21, 0
      %p85 = por %p83, %p84
      %p86 = scmp.lt.s32.totalorder %s23, 0
      %s87 = scalar_select %p86, %s23, 0
      %p88 = scmp.lt.s32.totalorder %s30, 0
      %s89 = scalar_select %p88, %s30, 0
      %s90 = ssub.s32 %s22, %s34
      %s91 = ssub.s32 %s87, %s89
      %s92 = sor.u32 %s90, %s91
      %p93 = scmp.eq.s32.totalorder %s92, 0
      %s95 = sadd.s32 %s94, 1
      %s96 = scalar_select %p93, %s94, %s95
      %p99 = pneg %p93
      %p100 = scmp.eq.s32.totalorder %s15, 3
      %p101 = por %p99, %p100
      %p102 = scmp.ne.s32.totalorder %s94, %s97
      %p103 = scmp.eq.s32.totalorder %s15, 0
      %p104 = por %p102, %p103
      %p105 = scmp.ne.s32.totalorder %s94, %s97
      %p106 = scmp.eq.s32.totalorder %s20, 3
      %p107 = por %p105, %p106
      %p108 = scmp.ne.s32.totalorder %s97, %s98
      %p109 = scmp.eq.s32.totalorder %s20, 0
      %p110 = por %p108, %p109
      %p111 = scmp.ne.s32.totalorder %s97, %s98
      %p112 = scmp.eq.s32.totalorder %s21, 3
      %p113 = por %p111, %p112
      %p115 = scmp.ne.s32.totalorder %s98, %s114
      %p116 = scmp.eq.s32.totalorder %s21, 0
      %p117 = por %p115, %p116
      %p118 = scmp.lt.s32.totalorder %s23, 0
      %s119 = scalar_select %p118, %s23, 0
      %p120 = scmp.lt.s32.totalorder %s30, 0
      %s121 = scalar_select %p120, %s30, 0
      %s122 = ssub.s32 %s22, %s34
      %s123 = ssub.s32 %s119, %s121
      %s124 = sor.u32 %s122, %s123
      %p125 = scmp.eq.s32.totalorder %s124, 0
      %s127 = sadd.s32 %s126, 1
      %s128 = scalar_select %p125, %s126, %s127
      %p131 = pneg %p125
      %p132 = scmp.eq.s32.totalorder %s15, 3
      %p133 = por %p131, %p132
      %p134 = scmp.ne.s32.totalorder %s126, %s129
      %p135 = scmp.eq.s32.totalorder %s15, 0
      %p136 = por %p134, %p135
      %p137 = scmp.ne.s32.totalorder %s126, %s129
      %p138 = scmp.eq.s32.totalorder %s20, 3
      %p139 = por %p137, %p138
      %p140 = scmp.ne.s32.totalorder %s129, %s130
      %p141 = scmp.eq.s32.totalorder %s20, 0
      %p142 = por %p140, %p141
      %p143 = scmp.ne.s32.totalorder %s129, %s130
      %p144 = scmp.eq.s32.totalorder %s21, 3
      %p145 = por %p143, %p144
      %p147 = scmp.ne.s32.totalorder %s130, %s146
      %p148 = scmp.eq.s32.totalorder %s21, 0
      %p149 = por %p147, %p148
      %s150 = ssub.s32 %s22, %s34
      %p151 = scmp.eq.s32.totalorder %s150, 0
      %s153 = sadd.s32 %s152, 1
      %s154 = scalar_select %p151, %s152, %s153
      %p157 = pneg %p151
      %p158 = scmp.eq.s32.totalorder %s15, 3
      %p159 = por %p157, %p158
      %p160 = scmp.ne.s32.totalorder %s152, %s155
      %p161 = scmp.eq.s32.totalorder %s15, 0
      %p162 = por %p160, %p161
      %p163 = scmp.ne.s32.totalorder %s152, %s155
      %p164 = scmp.eq.s32.totalorder %s20, 3
      %p165 = por %p163, %p164
      %p166 = scmp.ne.s32.totalorder %s155, %s156
      %p167 = scmp.eq.s32.totalorder %s20, 0
      %p168 = por %p166, %p167
      %p169 = scmp.ne.s32.totalorder %s155, %s156
      %p170 = scmp.eq.s32.totalorder %s21, 3
      %p171 = por %p169, %p170
      %p173 = scmp.ne.s32.totalorder %s156, %s172
      %p174 = scmp.eq.s32.totalorder %s21, 0
      %p175 = por %p173, %p174
      %p176 = scmp.le.s32.totalorder 1, %s15
      %p177 = scmp.lt.s32.totalorder %s15, 5
      %p178 = pnand %p176, %p177
      %p179 = pneg %p178
      // Predicated region
      $region9: #{tpu_custom_call.1} parent=5 // pred_check
        _
      $region10: #{tpu_custom_call.1} parent=5 // pred_check_branch
        %181 = sbr.rel (%p178) target = $region12
      $region11: #{tpu_custom_call.1} parent=5 // pred_region
        %s182 = ssub.s32 %s15, 1
        // Predicated region
        $region13: #{tpu_custom_call.1} parent=11 // pred_check
          %p183 = pneg %p57
        $region14: #{tpu_custom_call.1} parent=11 // pred_check_branch
          %185 = sbr.rel (%p183) target = $region16
        $region15: #{tpu_custom_call.1} parent=11 // pred_region
          %p186 = scmp.lt.s32.totalorder %s25, 0
          %s187 = scalar_select %p186, %s25, 0
          %s189 = ssub.s32 64, 64
          %190 = vsyncadd [#allocation3], %s189
          %s191 = smul.addr %s187, 64
          %s192 = scalar_lea.hbm %s0, %s191
          %s194 = sshll.u32 [#allocation2], 4
          %s195 = int_to_ptr.vmem [resolvable:$true] %s194
          %197 = dma.hbm_to_vmem [thread:$0]  %s192, 64, %s195, [#allocation3]
        $region16: #{tpu_custom_call.1} parent=11 // pred_fallthru
          _
        // Predicated region
        $region17: #{tpu_custom_call.1} parent=11 // pred_check
          %p198 = pneg %p78
        $region18: #{tpu_custom_call.1} parent=11 // pred_check_branch
          %200 = sbr.rel (%p198) target = $region20
        $region19: #{tpu_custom_call.1} parent=11 // pred_region
          %s202 = ssub.s32 256, 256
          %203 = vsyncadd [#allocation6], %s202
          %s204 = sshll.u32 [#allocation5], 4
          %s205 = int_to_ptr.vmem [resolvable:$true] %s204
          %210 = dma.hbm_to_vmem [thread:$0]  %s1, 256, %s205, [#allocation6], 128, 128, 8
        $region20: #{tpu_custom_call.1} parent=11 // pred_fallthru
          _
      $region12: #{tpu_custom_call.1} parent=5 // pred_fallthru
        _
      %p211 = scmp.lt.s32.totalorder %s15, 4
      // Predicated region
      $region21: #{tpu_custom_call.1} parent=5 // pred_check
        %p212 = pneg %p211
      $region22: #{tpu_custom_call.1} parent=5 // pred_check_branch
        %214 = sbr.rel (%p212) target = $region24
      $region23: #{tpu_custom_call.1} parent=5 // pred_region
        // Predicated region
        $region25: #{tpu_custom_call.1} parent=23 // pred_check
          %p215 = pneg %p104
        $region26: #{tpu_custom_call.1} parent=23 // pred_check_branch
          %217 = sbr.rel (%p215) target = $region28
        $region27: #{tpu_custom_call.1} parent=23 // pred_region
          %s218 = sand.u32 %s15, 1
          %s219 = scalar_lea.sflag [#allocation3], %s218
          %s220 = sand.u32 %s94, 1
          %s221 = smul.addr %s220, 4
          %s222 = scalar_lea.vmem [#allocation7], %s221
          %p223 = scmp.lt.s32.totalorder %s23, 0
          %s224 = scalar_select %p223, %s23, 0
          %s226 = ssub.s32 64, 64
          %227 = vsyncadd %s219, %s226
          %s228 = sadd.s32 %s224, %s22
          %s229 = smul.addr %s228, 64
          %s230 = scalar_lea.hbm %s2, %s229
          %s232 = sshll.u32 %s222, 4
          %s233 = int_to_ptr.vmem [resolvable:$true] %s232
          %235 = dma.hbm_to_vmem [thread:$0]  %s230, 64, %s233, %s219
        $region28: #{tpu_custom_call.1} parent=23 // pred_fallthru
          _
        // Predicated region
        $region29: #{tpu_custom_call.1} parent=23 // pred_check
          %p236 = pneg %p136
        $region30: #{tpu_custom_call.1} parent=23 // pred_check_branch
          %238 = sbr.rel (%p236) target = $region32
        $region31: #{tpu_custom_call.1} parent=23 // pred_region
          %s239 = sand.u32 %s15, 1
          %s240 = scalar_lea.sflag [#allocation3], %s239
          %s241 = sand.u32 %s126, 1
          %s242 = smul.addr %s241, 4
          %s243 = scalar_lea.vmem [#allocation8], %s242
          %p244 = scmp.lt.s32.totalorder %s23, 0
          %s245 = scalar_select %p244, %s23, 0
          %s247 = ssub.s32 64, 64
          %248 = vsyncadd %s240, %s247
          %s249 = sadd.s32 %s245, %s22
          %s250 = smul.addr %s249, 64
          %s251 = scalar_lea.hbm %s3, %s250
          %s253 = sshll.u32 %s243, 4
          %s254 = int_to_ptr.vmem [resolvable:$true] %s253
          %256 = dma.hbm_to_vmem [thread:$0]  %s251, 64, %s254, %s240
        $region32: #{tpu_custom_call.1} parent=23 // pred_fallthru
          _
      $region24: #{tpu_custom_call.1} parent=5 // pred_fallthru
        _
      %p257 = scmp.le.s32.totalorder 1, %s15
      %p258 = scmp.lt.s32.totalorder %s15, 5
      %p259 = pnand %p257, %p258
      %p260 = pneg %p259
      // Predicated region
      $region33: #{tpu_custom_call.1} parent=5 // pred_check
        _
      $region34: #{tpu_custom_call.1} parent=5 // pred_check_branch
        %262 = sbr.rel (%p259) target = $region36
      $region35: #{tpu_custom_call.1} parent=5 // pred_region
        %s263 = ssub.s32 %s15, 1
        // Predicated region
        $region37: #{tpu_custom_call.1} parent=35 // pred_check
          %p264 = pneg %p57
        $region38: #{tpu_custom_call.1} parent=35 // pred_check_branch
          %266 = sbr.rel (%p264) target = $region40
        $region39: #{tpu_custom_call.1} parent=35 // pred_region
          %267 = dma.done [#allocation3], 64
        $region40: #{tpu_custom_call.1} parent=35 // pred_fallthru
          _
        // Predicated region
        $region41: #{tpu_custom_call.1} parent=35 // pred_check
          %p268 = pneg %p78
        $region42: #{tpu_custom_call.1} parent=35 // pred_check_branch
          %270 = sbr.rel (%p268) target = $region44
        $region43: #{tpu_custom_call.1} parent=35 // pred_region
          %271 = dma.done [#allocation6], 256
        $region44: #{tpu_custom_call.1} parent=35 // pred_fallthru
          _
        %s272 = sand.u32 %s20, 1
        %s273 = scalar_lea.sflag [#allocation3], %s272
        %s274 = sand.u32 %s97, 1
        %s275 = smul.addr %s274, 4
        %s276 = scalar_lea.vmem [#allocation7], %s275
        // Predicated region
        $region45: #{tpu_custom_call.1} parent=35 // pred_check
          %p277 = pneg %p110
        $region46: #{tpu_custom_call.1} parent=35 // pred_check_branch
          %279 = sbr.rel (%p277) target = $region48
        $region47: #{tpu_custom_call.1} parent=35 // pred_region
          %280 = dma.done %s273, 64
        $region48: #{tpu_custom_call.1} parent=35 // pred_fallthru
          _
        %s281 = sand.u32 %s20, 1
        %s282 = scalar_lea.sflag [#allocation3], %s281
        %s283 = sand.u32 %s129, 1
        %s284 = smul.addr %s283, 4
        %s285 = scalar_lea.vmem [#allocation8], %s284
        // Predicated region
        $region49: #{tpu_custom_call.1} parent=35 // pred_check
          %p286 = pneg %p142
        $region50: #{tpu_custom_call.1} parent=35 // pred_check_branch
          %288 = sbr.rel (%p286) target = $region52
        $region51: #{tpu_custom_call.1} parent=35 // pred_region
          %289 = dma.done %s282, 64
        $region52: #{tpu_custom_call.1} parent=35 // pred_fallthru
          _
        %p290 = pneg %p57
        %p291 = pneg %p54
        %p292 = pneg %p78
        %p293 = pneg %p75
        %s294 = sand.u32 %s20, 1
        %s295 = scalar_lea.sflag [#allocation3], %s294
        %s296 = sand.u32 %s97, 1
        %s297 = smul.addr %s296, 4
        %s298 = scalar_lea.vmem [#allocation7], %s297
        %p299 = pneg %p110
        %p300 = pneg %p107
        %s301 = sand.u32 %s20, 1
        %s302 = scalar_lea.sflag [#allocation3], %s301
        %s303 = sand.u32 %s129, 1
        %s304 = smul.addr %s303, 4
        %s305 = scalar_lea.vmem [#allocation8], %s304
        %p306 = pneg %p142
        %p307 = pneg %p139
        %p308 = pneg %p168
        %p309 = pneg %p165
        %s310 = sand.u32 %s155, 1
        %s311 = scalar_lea.sflag [#allocation4], %s310
        %s312 = sand.u32 %s155, 1
        %s313 = scalar_lea.vmem [#allocation9], %s312
        %p314 = scmp.lt.s32.totalorder %s25, 0
        %s315 = scalar_select %p314, %s25, 0
        %p316 = scmp.lt.s32.totalorder %s25, 0
        %s317 = scalar_select %p316, %s25, 0
        %p318 = scmp.lt.s32.totalorder %s25, 0
        %s319 = scalar_select %p318, %s25, 0
        %p320 = scmp.eq.s32.totalorder %s25, 0
        // Predicated region
        $region53: #{tpu_custom_call.1} parent=35 // pred_check
          %p321 = pneg %p320
        $region54: #{tpu_custom_call.1} parent=35 // pred_check_branch
          %323 = sbr.rel (%p321) target = $region56
        $region55: #{tpu_custom_call.1} parent=35 // pred_region
          %324 = vst [vmem:[%s313] sm:$0x1] 0.0
        $region56: #{tpu_custom_call.1} parent=35 // pred_fallthru
          _
        %v325 = vld [vmem:[%s276] sm:$0xf]
        %v326 = vld [vmem:[%s285] sm:$0xf]
        %v327 = vsub.f32 %v325, %v326
        %v328 = vld [vmem:[#allocation2] sm:$0xf]
        %v329 = vld [vmem:[#allocation5] sm:$0xff]
        %v330 = vld [vmem:[#allocation5 + $0x8] sm:$0xff]
        %vm331 = vcmask 130048
        %v333 = vsel %vm331, %v328, 0
        %335 = vmatprep.subr.mxu0 0.0
        %336 = vmatpush1.msra.mxu0 %v329
        %337 = vmatprep.subr.mxu0 0.0
        %338 = vmatpush1.msra.mxu0 %v330
        %339 = vmatprep.subr.mxu0 0.0
        %340 = vmatpush1.msra.mxu0 0.0
        %341 = vmatprep.subr.mxu0 0.0
        %342 = vmatpush1.msra.mxu0 0.0
        %343 = vmatprep.subr.mxu0 0.0
        %344 = vmatpush1.msra.mxu0 0.0
        %345 = vmatprep.subr.mxu0 0.0
        %346 = vmatpush1.msra.mxu0 0.0
        %347 = vmatprep.subr.mxu0 0.0
        %348 = vmatpush1.msra.mxu0 0.0
        %349 = vmatprep.subr.mxu0 0.0
        %350 = vmatpush1.msra.mxu0 0.0
        %351 = vmatprep.subr.mxu0 0.0
        %352 = vmatpush1.msra.mxu0 0.0
        %353 = vmatprep.subr.mxu0 0.0
        %354 = vmatpush1.msra.mxu0 0.0
        %355 = vmatprep.subr.mxu0 0.0
        %356 = vmatpush1.msra.mxu0 0.0
        %357 = vmatprep.subr.mxu0 0.0
        %358 = vmatpush1.msra.mxu0 0.0
        %359 = vmatprep.subr.mxu0 0.0
        %360 = vmatpush1.msra.mxu0 0.0
        %361 = vmatprep.subr.mxu0 0.0
        %362 = vmatpush1.msra.mxu0 0.0
        %363 = vmatprep.subr.mxu0 0.0
        %364 = vmatpush1.msra.mxu0 0.0
        %365 = vmatprep.subr.mxu0 0.0
        %366 = vmatpush1.msra.mxu0 0.0
        %367 = vmatprep.subr.mxu0 0.0
        %368 = vmatpush1.msra.mxu0 0.0
        %369 = vmatprep.subr.mxu0 0.0
        %370 = vmatpush1.msra.mxu0 0.0
        %371 = vmatprep.subr.mxu0 0.0
        %372 = vmatpush1.msra.mxu0 0.0
        %373 = vmatprep.subr.mxu0 0.0
        %374 = vmatpush1.msra.mxu0 0.0
        %375 = vmatprep.subr.mxu0 0.0
        %376 = vmatpush1.msra.mxu0 0.0
        %377 = vmatprep.subr.mxu0 0.0
        %378 = vmatpush1.msra.mxu0 0.0
        %379 = vmatprep.subr.mxu0 0.0
        %380 = vmatpush1.msra.mxu0 0.0
        %381 = vmatprep.subr.mxu0 0.0
        %382 = vmatpush1.msra.mxu0 0.0
        %383 = vmatprep.subr.mxu0 0.0
        %384 = vmatpush1.msra.mxu0 0.0
        %385 = vmatprep.subr.mxu0 0.0
        %386 = vmatpush1.msra.mxu0 0.0
        %387 = vmatprep.subr.mxu0 0.0
        %388 = vmatpush1.msra.mxu0 0.0
        %389 = vmatprep.subr.mxu0 0.0
        %390 = vmatpush1.msra.mxu0 0.0
        %391 = vmatprep.subr.mxu0 0.0
        %392 = vmatpush1.msra.mxu0 0.0
        %393 = vmatprep.subr.mxu0 0.0
        %394 = vmatpush1.msra.mxu0 0.0
        %395 = vmatprep.subr.mxu0 0.0
        %396 = vmatpush1.msra.mxu0 0.0
        %397 = vmatprep.subr.mxu0 0.0
        %398 = vmatpush1.msra.mxu0 0.0
        %399 = vmatprep.mubr.f32.mxu0 0.0
        %400 = vmatmul.mubr.f32.gmra.mrb[0].mxu0 %v333
        %v401 = vpop.f32.mrb[0].mxu0
        %v402 = vadd.f32 0.0, %v401
        %v403 = vpop.f32.mrb[0].mxu0
        %404 = vdwg.mxu0
        %v405 = vmul.f32 %v327, %v402
        %v406 = vld [vmem:[%s313] sm:$0x1]
        %vm407 = vcmask 1043456
        %v408 = vsel %vm407, %v405, 0.0
        %v409 = vrot.slane %v408, 4
        %v410 = vadd.f32 %v408, %v409
        %v411 = vrot.slane %v410, 2
        %v412 = vadd.f32 %v410, %v411
        %v413 = vrot.slane %v412, 1
        %v414 = vadd.f32 %v412, %v413
        %v415 = vadd.f32 %v406, %v414
        %416 = vst [vmem:[%s313] sm:$0x1] %v415
        %s417 = sand.u32 %s155, 1
        %s418 = scalar_lea.sflag [#allocation4], %s417
        %s419 = sand.u32 %s155, 1
        %s420 = scalar_lea.vmem [#allocation9], %s419
        // Predicated region
        $region57: #{tpu_custom_call.1} parent=35 // pred_check
          %p421 = pneg %p165
        $region58: #{tpu_custom_call.1} parent=35 // pred_check_branch
          %423 = sbr.rel (%p421) target = $region60
        $region59: #{tpu_custom_call.1} parent=35 // pred_region
          %s425 = ssub.s32 16, 16
          %426 = vsyncadd %s418, %s425
          %s427 = smul.addr %s24, 16
          %s428 = scalar_lea.hbm %s4, %s427
          %s430 = sshll.u32 %s420, 4
          %s431 = int_to_ptr.vmem [resolvable:$true] %s430
          %433 = dma.vmem_to_hbm [thread:$0]  %s431, 16, %s428, %s418
        $region60: #{tpu_custom_call.1} parent=35 // pred_fallthru
          _
      $region36: #{tpu_custom_call.1} parent=5 // pred_fallthru
        _
      %p434 = scmp.le.s32.totalorder 2, %s15
      // Predicated region
      $region61: #{tpu_custom_call.1} parent=5 // pred_check
        %p435 = pneg %p434
      $region62: #{tpu_custom_call.1} parent=5 // pred_check_branch
        %437 = sbr.rel (%p435) target = $region64
      $region63: #{tpu_custom_call.1} parent=5 // pred_region
        %s438 = ssub.s32 %s15, 2
        // Predicated region
        $region65: #{tpu_custom_call.1} parent=63 // pred_check
          %p439 = pneg %p171
        $region66: #{tpu_custom_call.1} parent=63 // pred_check_branch
          %441 = sbr.rel (%p439) target = $region68
        $region67: #{tpu_custom_call.1} parent=63 // pred_region
          %s442 = sand.u32 %s156, 1
          %s443 = scalar_lea.sflag [#allocation4], %s442
          %s444 = sand.u32 %s156, 1
          %s445 = scalar_lea.vmem [#allocation9], %s444
          %446 = dma.done %s443, 16
        $region68: #{tpu_custom_call.1} parent=63 // pred_fallthru
          _
      $region64: #{tpu_custom_call.1} parent=5 // pred_fallthru
        _
    $region6: #{tpu_custom_call.1} parent=1 // loop_footer
      %s19 = sadd.s32 1, %s15
    $region7: #{tpu_custom_call.1} parent=1 // loop_footer_branch
      %14 = sbr.rel target = $region3
    $region8: #{tpu_custom_call.1} parent=1 // loop_exit
      _
    %447 = vsyncpa [#allocation3], 1
    %s448 = scalar_lea.sflag [#allocation3], 1
    %449 = vsyncpa %s448, 1
    %450 = vsyncpa [#allocation6], 1
    %451 = vsyncpa [#allocation4], 1
    %s452 = scalar_lea.sflag [#allocation4], 1
    %453 = vsyncpa %s452, 1

</llo_original>
